<compile_context>
chip_gen: v7x
topology: tpu7x:2x2x1
jax: 0.10.0
libtpu: 0.0.40
codegen_flags: <defaults>
</compile_context>

<pallas_src>
import functools

import jax
import jax.numpy as jnp
from jax import lax
from jax.experimental import pallas as pl
from jax.experimental.pallas import tpu as pltpu


# -----------------------------------------------------------------------------
# Pallas kernel: whole RepConvBlock (chain of folded 3x3 conv + bias + SiLU)
# -----------------------------------------------------------------------------
def _rep_block_kernel(x_ref, w_ref, b_ref, m_ref, o_ref, buf_a, buf_b, *,
                      H, W, n_layers):
    """One grid step = one batch image, all `n_layers` stages fused.

    x_ref : (1, Cin0, H*W)          input image, spatial flattened onto lanes
    w_ref : (n_layers*9, Cm, Cm)    folded per-tap weights, zero-padded to Cm, f32
    b_ref : (n_layers, Cm, 1)       folded biases, zero-padded to Cm, f32
    m_ref : (2, H*W)                0/1 lane masks killing horizontal row wrap
                                    (row 0: valid for dw=-1, row 1: valid for dw=+1)
    o_ref : (1, Cout, H*W)          final output block
    buf_a : (Cm, H*W + 2*(W+1))     VMEM ping-pong activation buffer (padded)
    buf_b : (Cm, H*W + 2*(W+1))     VMEM ping-pong activation buffer (padded)
    """
    HW = H * W
    M = W + 1  # margin >= max |flat offset| of any 3x3 tap
    cmax = buf_a.shape[0]
    cin0 = x_ref.shape[1]

    # Zero the buffers once; afterwards only the centre region is rewritten, so the
    # margins stay zero for every stage (free vertical zero padding) and padded
    # channel rows stay consistent (SiLU(0+0) = 0 from padded weights/bias).
    buf_a[...] = jnp.zeros(buf_a.shape, jnp.float32)
    if n_layers > 1:
        buf_b[...] = jnp.zeros(buf_b.shape, jnp.float32)
    buf_a[0:cin0, M:M + HW] = x_ref[0].astype(jnp.float32)

    mask_l = m_ref[0:1, :]  # valid lanes when reading the left  neighbour (dw=-1)
    mask_r = m_ref[1:2, :]  # valid lanes when reading the right neighbour (dw=+1)

    src, dst = buf_a, buf_b
    for l in range(n_layers):                         # static unroll over stages
        acc = jnp.zeros((cmax, HW), jnp.float32)
        for dh in (-1, 0, 1):
            for dw in (-1, 0, 1):
                off = dh * W + dw
                # Static lane-offset slice == the whole image shifted by (dh, dw);
                # the zero margins make vertically out-of-range taps read zeros.
                plane = src[:, M + off:M + off + HW]            # (Cm, HW)
                if dw == -1:
                    plane = plane * mask_l
                elif dw == 1:
                    plane = plane * mask_r
                tap = (dh + 1) * 3 + (dw + 1)
                acc = acc + jnp.dot(w_ref[l * 9 + tap], plane,
                                    preferred_element_type=jnp.float32)
        acc = acc + b_ref[l]                                    # (Cm,1) -> lanes
        act = acc * (1.0 / (1.0 + jnp.exp(-acc)))               # SiLU
        if l == n_layers - 1:
            cout = o_ref.shape[1]
            o_ref[0] = act[:cout, :].astype(o_ref.dtype)
        else:
            dst[:, M:M + HW] = act                              # stays in VMEM
            src, dst = dst, src


def fused_rep_block(x, layers):
    """Runs SiLU(conv3x3(.)+b) for every (w_eff, b_eff) in `layers`, fused in one
    pallas_call. x: (N, Cin0, H, W); each w_eff: (Cout_l, Cin_l, 3, 3)."""
    N, cin0, H, W = x.shape
    HW = H * W
    M = W + 1
    n_layers = len(layers)
    cmax = max([cin0] + [w.shape[0] for w, _ in layers]
               + [w.shape[1] for w, _ in layers])
    cout_final = layers[-1][0].shape[0]

    # Tiny constant prep (weights / bias / edge masks), not on the activation path.
    w_stack, b_stack = [], []
    for w, b in layers:
        co, ci = w.shape[0], w.shape[1]
        wp = jnp.zeros((cmax, cmax, 3, 3), jnp.float32).at[:co, :ci].set(
            w.astype(jnp.float32))
        w_stack.append(jnp.transpose(wp.reshape(cmax, cmax, 9), (2, 0, 1)))
        b_stack.append(jnp.zeros((cmax,), jnp.float32).at[:co].set(
            b.astype(jnp.float32)).reshape(cmax, 1))
    w_all = jnp.concatenate(w_stack, axis=0)          # (n_layers*9, cmax, cmax)
    b_all = jnp.stack(b_stack, axis=0)                # (n_layers, cmax, 1)

    col = jnp.arange(HW, dtype=jnp.int32) % W
    edge_masks = jnp.stack([(col >= 1).astype(jnp.float32),
                            (col <= W - 2).astype(jnp.float32)])  # (2, HW)

    # Free (contiguous) reshape -- no HBM transpose of the activations.
    x_flat = x.reshape(N, cin0, HW)

    kernel = functools.partial(_rep_block_kernel, H=H, W=W, n_layers=n_layers)
    out = pl.pallas_call(
        kernel,
        out_shape=jax.ShapeDtypeStruct((N, cout_final, HW), x.dtype),
        grid=(N,),  # >= 2 grid steps for the demo batch -> both v7x TCs busy
        in_specs=[
            pl.BlockSpec((1, cin0, HW), lambda n: (n, 0, 0)),
            pl.BlockSpec((n_layers * 9, cmax, cmax), lambda n: (0, 0, 0)),
            pl.BlockSpec((n_layers, cmax, 1), lambda n: (0, 0, 0)),
            pl.BlockSpec((2, HW), lambda n: (0, 0)),
        ],
        out_specs=pl.BlockSpec((1, cout_final, HW), lambda n: (n, 0, 0)),
        scratch_shapes=[pltpu.VMEM((cmax, HW + 2 * M), jnp.float32),
                        pltpu.VMEM((cmax, HW + 2 * M), jnp.float32)],
        compiler_params=pltpu.CompilerParams(
            dimension_semantics=("parallel",),
            vmem_limit_bytes=32 * 1024 * 1024,
        ),
    )(x_flat, w_all, b_all, edge_masks)
    return out.reshape(N, cout_final, H, W)


# -----------------------------------------------------------------------------
# Parameter folding (BN -> conv, RepConv -> single 3x3) and the block forward
# -----------------------------------------------------------------------------
def fold_conv_bn(w, bn, eps=1e-5):
    gamma, beta, mean, var = bn
    s = gamma / jnp.sqrt(var + eps)
    return w * s[:, None, None, None], beta - s * mean


def fold_repconv(w3, bn3, w1, bn1, eps=1e-5):
    w3e, b3 = fold_conv_bn(w3, bn3, eps)
    w1e, b1 = fold_conv_bn(w1, bn1, eps)
    w = w3e.at[:, :, 1, 1].add(w1e[:, :, 0, 0])
    return w, b3 + b1


def rep_conv_block_forward(x, params, repeat):
    """RepConvBlock.forward: cv2(cb(cv1(x))) — all stages fused in one kernel."""
    layers = []
    if repeat == 1:                                              # cb = cv2 = Identity
        layers.append(fold_conv_bn(params["cv1_w"], params["cv1_bn"]))
    else:
        layers.append(fold_repconv(params["cv1_w3"], params["cv1_bn3"],
                                   params["cv1_w1"], params["cv1_bn1"]))  # cv1
        for blk in params.get("cb", []):                         # cb = RepConv x (repeat-2)
            layers.append(fold_repconv(blk["w3"], blk["bn3"], blk["w1"], blk["bn1"]))
        layers.append(fold_conv_bn(params["cv2_w"], params["cv2_bn"]))    # cv2
    return fused_rep_block(x, layers)


# -----------------------------------------------------------------------------
# Plain-JAX reference (mirrors the PyTorch module op-by-op, unfolded)
# -----------------------------------------------------------------------------
def _conv2d_ref(x, w, pad):
    return lax.conv_general_dilated(
        x, w, window_strides=(1, 1), padding=((pad, pad), (pad, pad)),
        dimension_numbers=("NCHW", "OIHW", "NCHW"))


def _bn_ref(x, bn, eps=1e-5):
    gamma, beta, mean, var = bn
    inv = gamma / jnp.sqrt(var + eps)
    return (x - mean[None, :, None, None]) * inv[None, :, None, None] \
        + beta[None, :, None, None]


def _silu(x):
    return x * (1.0 / (1.0 + jnp.exp(-x)))


def _conv_block_ref(x, w, bn):
    return _silu(_bn_ref(_conv2d_ref(x, w, 1), bn))


def _repconv_ref(x, w3, bn3, w1, bn1):
    return _silu(_bn_ref(_conv2d_ref(x, w3, 1), bn3) +
                 _bn_ref(_conv2d_ref(x, w1, 0), bn1))


def rep_conv_block_ref(x, params, repeat):
    if repeat == 1:
        return _conv_block_ref(x, params["cv1_w"], params["cv1_bn"])
    y = _repconv_ref(x, params["cv1_w3"], params["cv1_bn3"],
                     params["cv1_w1"], params["cv1_bn1"])
    for blk in params.get("cb", []):
        y = _repconv_ref(y, blk["w3"], blk["bn3"], blk["w1"], blk["bn1"])
    return _conv_block_ref(y, params["cv2_w"], params["cv2_bn"])


# -----------------------------------------------------------------------------
# Demo / self-check
# -----------------------------------------------------------------------------
def _make_bn(key, c):
    k1, k2, k3, k4 = jax.random.split(key, 4)
    return (1.0 + 0.1 * jax.random.normal(k1, (c,), jnp.float32),
            0.1 * jax.random.normal(k2, (c,), jnp.float32),
            0.1 * jax.random.normal(k3, (c,), jnp.float32),
            jax.random.uniform(k4, (c,), jnp.float32, 0.5, 1.5))


def _make_conv_w(key, cout, cin, k):
    return 0.3 * jax.random.normal(key, (cout, cin, k, k), jnp.float32)


if __name__ == "__main__":
    key = jax.random.PRNGKey(0)
    N, C, Hs, Ws = 2, 4, 16, 16
    kx, kp = jax.random.split(key)
    x = jax.random.normal(kx, (N, C, Hs, Ws), jnp.float32)  # NCHW

    # repeat = 1:  cv1 = Conv(C, C, 3), cb = cv2 = Identity
    k1, k2, kp = jax.random.split(kp, 3)
    params1 = {"cv1_w": _make_conv_w(k1, C, C, 3), "cv1_bn": _make_bn(k2, C)}
    y1 = rep_conv_block_forward(x, params1, repeat=1)
    jax.block_until_ready(y1)
    r1 = rep_conv_block_ref(x, params1, repeat=1)
    assert y1.shape == (N, C, Hs, Ws)
    assert jnp.allclose(y1, r1, atol=1e-3, rtol=1e-3), "repeat=1 mismatch"

    # repeat = 3 (ratio=1.0): cv1 = RepConv, cb = [RepConv], cv2 = Conv
    ks = jax.random.split(kp, 10)
    params3 = {
        "cv1_w3": _make_conv_w(ks[0], C, C, 3), "cv1_bn3": _make_bn(ks[1], C),
        "cv1_w1": _make_conv_w(ks[2], C, C, 1), "cv1_bn1": _make_bn(ks[3], C),
        "cb": [{"w3": _make_conv_w(ks[4], C, C, 3), "bn3": _make_bn(ks[5], C),
                "w1": _make_conv_w(ks[6], C, C, 1), "bn1": _make_bn(ks[7], C)}],
        "cv2_w": _make_conv_w(ks[8], C, C, 3), "cv2_bn": _make_bn(ks[9], C),
    }
    y3 = rep_conv_block_forward(x, params3, repeat=3)
    jax.block_until_ready(y3)
    r3 = rep_conv_block_ref(x, params3, repeat=3)
    assert y3.shape == (N, C, Hs, Ws)
    assert jnp.allclose(y3, r3, atol=1e-3, rtol=1e-3), "repeat=3 mismatch"

    print("KERNEL_OK")
</pallas_src>

<mosaic_0001>
module attributes {stable_mosaic.version = 11 : i64} {
  func.func @_rep_block_kernel(%arg0: i32, %arg1: memref<1x4x256xf32, #tpu.memory_space<vmem>>, %arg2: memref<9x4x4xf32, #tpu.memory_space<vmem>>, %arg3: memref<1x4x1xf32, #tpu.memory_space<vmem>>, %arg4: memref<2x256xf32, #tpu.memory_space<vmem>>, %arg5: memref<1x4x256xf32, #tpu.memory_space<vmem>>, %arg6: memref<4x290xf32, #tpu.memory_space<vmem>>, %arg7: memref<4x290xf32, #tpu.memory_space<vmem>>) attributes {dimension_semantics = [#tpu.dimension_semantics<parallel>], iteration_bounds = array<i64: 2>, scalar_prefetch = 0 : i64, scratch_operands = 2 : i64, tpu.core_type = #tpu.core_type<tc>, window_params = [{transform_indices = @transform_0, window_bounds = array<i64: 1, 4, 256>}, {pipeline_mode = #tpu.pipeline_mode<synchronous>, transform_indices = @transform_1, window_bounds = array<i64: 9, 4, 4>}, {pipeline_mode = #tpu.pipeline_mode<synchronous>, transform_indices = @transform_2, window_bounds = array<i64: 1, 4, 1>}, {pipeline_mode = #tpu.pipeline_mode<synchronous>, transform_indices = @transform_3, window_bounds = array<i64: 2, 256>}, {transform_indices = @transform_4, window_bounds = array<i64: 1, 4, 256>}]} {
    %cst = arith.constant 0.000000e+00 : f32
    %0 = vector.broadcast %cst : f32 to vector<4x290xf32>
    %c0 = arith.constant 0 : index
    %c0_0 = arith.constant 0 : index
    %1 = vector.load %arg6[%c0, %c0_0] : memref<4x290xf32, #tpu.memory_space<vmem>>, vector<4x290xf32>
    tpu.vector_store %arg6[%c0, %c0_0], %0 {strides = array<i32>} : memref<4x290xf32, #tpu.memory_space<vmem>>, vector<4x290xf32>,
    %c0_1 = arith.constant 0 : index
    %c0_2 = arith.constant 0 : index
    %c0_3 = arith.constant 0 : index
    %2 = vector.load %arg1[%c0_1, %c0_2, %c0_3] : memref<1x4x256xf32, #tpu.memory_space<vmem>>, vector<1x4x256xf32>
    %3 = vector.shape_cast %2 : vector<1x4x256xf32> to vector<4x256xf32>
    %c0_4 = arith.constant 0 : index
    %c17 = arith.constant 17 : index
    %4 = vector.load %arg6[%c0_4, %c17] : memref<4x290xf32, #tpu.memory_space<vmem>>, vector<4x256xf32>
    tpu.vector_store %arg6[%c0_4, %c17], %3 {strides = array<i32>} : memref<4x290xf32, #tpu.memory_space<vmem>>, vector<4x256xf32>,
    %c0_5 = arith.constant 0 : index
    %c0_6 = arith.constant 0 : index
    %5 = vector.load %arg4[%c0_5, %c0_6] : memref<2x256xf32, #tpu.memory_space<vmem>>, vector<1x256xf32>
    %c1 = arith.constant 1 : index
    %c0_7 = arith.constant 0 : index
    %6 = vector.load %arg4[%c1, %c0_7] : memref<2x256xf32, #tpu.memory_space<vmem>>, vector<1x256xf32>
    %cst_8 = arith.constant 0.000000e+00 : f32
    %7 = vector.broadcast %cst_8 : f32 to vector<4x256xf32>
    %c0_9 = arith.constant 0 : index
    %c0_10 = arith.constant 0 : index
    %8 = vector.load %arg6[%c0_9, %c0_10] : memref<4x290xf32, #tpu.memory_space<vmem>>, vector<4x256xf32>
    %9 = vector.broadcast %5 : vector<1x256xf32> to vector<4x256xf32>
    %10 = arith.mulf %8, %9 : vector<4x256xf32>
    %c0_11 = arith.constant 0 : index
    %c0_12 = arith.constant 0 : index
    %c0_13 = arith.constant 0 : index
    %11 = vector.load %arg2[%c0_11, %c0_12, %c0_13] : memref<9x4x4xf32, #tpu.memory_space<vmem>>, vector<1x4x4xf32>
    %12 = vector.shape_cast %11 : vector<1x4x4xf32> to vector<4x4xf32>
    %cst_14 = arith.constant dense<0.000000e+00> : vector<4x256xf32>
    %13 = tpu.matmul %12, %10, %cst_14 {dimension_numbers = #tpu.dot_dimension_numbers<[1], [0], [0], [1], [0, 0, 1, 1], [], []>} : vector<4x4xf32>, vector<4x256xf32>, vector<4x256xf32> -> vector<4x256xf32>
    %14 = arith.addf %7, %13 : vector<4x256xf32>
    %c0_15 = arith.constant 0 : index
    %c1_16 = arith.constant 1 : index
    %15 = vector.load %arg6[%c0_15, %c1_16] : memref<4x290xf32, #tpu.memory_space<vmem>>, vector<4x256xf32>
    %c1_17 = arith.constant 1 : index
    %c0_18 = arith.constant 0 : index
    %c0_19 = arith.constant 0 : index
    %16 = vector.load %arg2[%c1_17, %c0_18, %c0_19] : memref<9x4x4xf32, #tpu.memory_space<vmem>>, vector<1x4x4xf32>
    %17 = vector.shape_cast %16 : vector<1x4x4xf32> to vector<4x4xf32>
    %cst_20 = arith.constant dense<0.000000e+00> : vector<4x256xf32>
    %18 = tpu.matmul %17, %15, %cst_20 {dimension_numbers = #tpu.dot_dimension_numbers<[1], [0], [0], [1], [0, 0, 1, 1], [], []>} : vector<4x4xf32>, vector<4x256xf32>, vector<4x256xf32> -> vector<4x256xf32>
    %19 = arith.addf %14, %18 : vector<4x256xf32>
    %c0_21 = arith.constant 0 : index
    %c2 = arith.constant 2 : index
    %20 = vector.load %arg6[%c0_21, %c2] : memref<4x290xf32, #tpu.memory_space<vmem>>, vector<4x256xf32>
    %21 = vector.broadcast %6 : vector<1x256xf32> to vector<4x256xf32>
    %22 = arith.mulf %20, %21 : vector<4x256xf32>
    %c2_22 = arith.constant 2 : index
    %c0_23 = arith.constant 0 : index
    %c0_24 = arith.constant 0 : index
    %23 = vector.load %arg2[%c2_22, %c0_23, %c0_24] : memref<9x4x4xf32, #tpu.memory_space<vmem>>, vector<1x4x4xf32>
    %24 = vector.shape_cast %23 : vector<1x4x4xf32> to vector<4x4xf32>
    %cst_25 = arith.constant dense<0.000000e+00> : vector<4x256xf32>
    %25 = tpu.matmul %24, %22, %cst_25 {dimension_numbers = #tpu.dot_dimension_numbers<[1], [0], [0], [1], [0, 0, 1, 1], [], []>} : vector<4x4xf32>, vector<4x256xf32>, vector<4x256xf32> -> vector<4x256xf32>
    %26 = arith.addf %19, %25 : vector<4x256xf32>
    %c0_26 = arith.constant 0 : index
    %c16 = arith.constant 16 : index
    %27 = vector.load %arg6[%c0_26, %c16] : memref<4x290xf32, #tpu.memory_space<vmem>>, vector<4x256xf32>
    %28 = vector.broadcast %5 : vector<1x256xf32> to vector<4x256xf32>
    %29 = arith.mulf %27, %28 : vector<4x256xf32>
    %c3 = arith.constant 3 : index
    %c0_27 = arith.constant 0 : index
    %c0_28 = arith.constant 0 : index
    %30 = vector.load %arg2[%c3, %c0_27, %c0_28] : memref<9x4x4xf32, #tpu.memory_space<vmem>>, vector<1x4x4xf32>
    %31 = vector.shape_cast %30 : vector<1x4x4xf32> to vector<4x4xf32>
    %cst_29 = arith.constant dense<0.000000e+00> : vector<4x256xf32>
    %32 = tpu.matmul %31, %29, %cst_29 {dimension_numbers = #tpu.dot_dimension_numbers<[1], [0], [0], [1], [0, 0, 1, 1], [], []>} : vector<4x4xf32>, vector<4x256xf32>, vector<4x256xf32> -> vector<4x256xf32>
    %33 = arith.addf %26, %32 : vector<4x256xf32>
    %c0_30 = arith.constant 0 : index
    %c17_31 = arith.constant 17 : index
    %34 = vector.load %arg6[%c0_30, %c17_31] : memref<4x290xf32, #tpu.memory_space<vmem>>, vector<4x256xf32>
    %c4 = arith.constant 4 : index
    %c0_32 = arith.constant 0 : index
    %c0_33 = arith.constant 0 : index
    %35 = vector.load %arg2[%c4, %c0_32, %c0_33] : memref<9x4x4xf32, #tpu.memory_space<vmem>>, vector<1x4x4xf32>
    %36 = vector.shape_cast %35 : vector<1x4x4xf32> to vector<4x4xf32>
    %cst_34 = arith.constant dense<0.000000e+00> : vector<4x256xf32>
    %37 = tpu.matmul %36, %34, %cst_34 {dimension_numbers = #tpu.dot_dimension_numbers<[1], [0], [0], [1], [0, 0, 1, 1], [], []>} : vector<4x4xf32>, vector<4x256xf32>, vector<4x256xf32> -> vector<4x256xf32>
    %38 = arith.addf %33, %37 : vector<4x256xf32>
    %c0_35 = arith.constant 0 : index
    %c18 = arith.constant 18 : index
    %39 = vector.load %arg6[%c0_35, %c18] : memref<4x290xf32, #tpu.memory_space<vmem>>, vector<4x256xf32>
    %40 = vector.broadcast %6 : vector<1x256xf32> to vector<4x256xf32>
    %41 = arith.mulf %39, %40 : vector<4x256xf32>
    %c5 = arith.constant 5 : index
    %c0_36 = arith.constant 0 : index
    %c0_37 = arith.constant 0 : index
    %42 = vector.load %arg2[%c5, %c0_36, %c0_37] : memref<9x4x4xf32, #tpu.memory_space<vmem>>, vector<1x4x4xf32>
    %43 = vector.shape_cast %42 : vector<1x4x4xf32> to vector<4x4xf32>
    %cst_38 = arith.constant dense<0.000000e+00> : vector<4x256xf32>
    %44 = tpu.matmul %43, %41, %cst_38 {dimension_numbers = #tpu.dot_dimension_numbers<[1], [0], [0], [1], [0, 0, 1, 1], [], []>} : vector<4x4xf32>, vector<4x256xf32>, vector<4x256xf32> -> vector<4x256xf32>
    %45 = arith.addf %38, %44 : vector<4x256xf32>
    %c0_39 = arith.constant 0 : index
    %c32 = arith.constant 32 : index
    %46 = vector.load %arg6[%c0_39, %c32] : memref<4x290xf32, #tpu.memory_space<vmem>>, vector<4x256xf32>
    %47 = vector.broadcast %5 : vector<1x256xf32> to vector<4x256xf32>
    %48 = arith.mulf %46, %47 : vector<4x256xf32>
    %c6 = arith.constant 6 : index
    %c0_40 = arith.constant 0 : index
    %c0_41 = arith.constant 0 : index
    %49 = vector.load %arg2[%c6, %c0_40, %c0_41] : memref<9x4x4xf32, #tpu.memory_space<vmem>>, vector<1x4x4xf32>
    %50 = vector.shape_cast %49 : vector<1x4x4xf32> to vector<4x4xf32>
    %cst_42 = arith.constant dense<0.000000e+00> : vector<4x256xf32>
    %51 = tpu.matmul %50, %48, %cst_42 {dimension_numbers = #tpu.dot_dimension_numbers<[1], [0], [0], [1], [0, 0, 1, 1], [], []>} : vector<4x4xf32>, vector<4x256xf32>, vector<4x256xf32> -> vector<4x256xf32>
    %52 = arith.addf %45, %51 : vector<4x256xf32>
    %c0_43 = arith.constant 0 : index
    %c33 = arith.constant 33 : index
    %53 = vector.load %arg6[%c0_43, %c33] : memref<4x290xf32, #tpu.memory_space<vmem>>, vector<4x256xf32>
    %c7 = arith.constant 7 : index
    %c0_44 = arith.constant 0 : index
    %c0_45 = arith.constant 0 : index
    %54 = vector.load %arg2[%c7, %c0_44, %c0_45] : memref<9x4x4xf32, #tpu.memory_space<vmem>>, vector<1x4x4xf32>
    %55 = vector.shape_cast %54 : vector<1x4x4xf32> to vector<4x4xf32>
    %cst_46 = arith.constant dense<0.000000e+00> : vector<4x256xf32>
    %56 = tpu.matmul %55, %53, %cst_46 {dimension_numbers = #tpu.dot_dimension_numbers<[1], [0], [0], [1], [0, 0, 1, 1], [], []>} : vector<4x4xf32>, vector<4x256xf32>, vector<4x256xf32> -> vector<4x256xf32>
    %57 = arith.addf %52, %56 : vector<4x256xf32>
    %c0_47 = arith.constant 0 : index
    %c34 = arith.constant 34 : index
    %58 = vector.load %arg6[%c0_47, %c34] : memref<4x290xf32, #tpu.memory_space<vmem>>, vector<4x256xf32>
    %59 = vector.broadcast %6 : vector<1x256xf32> to vector<4x256xf32>
    %60 = arith.mulf %58, %59 : vector<4x256xf32>
    %c8 = arith.constant 8 : index
    %c0_48 = arith.constant 0 : index
    %c0_49 = arith.constant 0 : index
    %61 = vector.load %arg2[%c8, %c0_48, %c0_49] : memref<9x4x4xf32, #tpu.memory_space<vmem>>, vector<1x4x4xf32>
    %62 = vector.shape_cast %61 : vector<1x4x4xf32> to vector<4x4xf32>
    %cst_50 = arith.constant dense<0.000000e+00> : vector<4x256xf32>
    %63 = tpu.matmul %62, %60, %cst_50 {dimension_numbers = #tpu.dot_dimension_numbers<[1], [0], [0], [1], [0, 0, 1, 1], [], []>} : vector<4x4xf32>, vector<4x256xf32>, vector<4x256xf32> -> vector<4x256xf32>
    %64 = arith.addf %57, %63 : vector<4x256xf32>
    %c0_51 = arith.constant 0 : index
    %c0_52 = arith.constant 0 : index
    %c0_53 = arith.constant 0 : index
    %65 = vector.load %arg3[%c0_51, %c0_52, %c0_53] : memref<1x4x1xf32, #tpu.memory_space<vmem>>, vector<1x4x1xf32>
    %66 = vector.shape_cast %65 : vector<1x4x1xf32> to vector<4x1xf32>
    %67 = vector.broadcast %66 : vector<4x1xf32> to vector<4x256xf32>
    %68 = arith.addf %64, %67 : vector<4x256xf32>
    %cst_54 = arith.constant 0.000000e+00 : f32
    %69 = vector.broadcast %cst_54 : f32 to vector<4x256xf32>
    %70 = arith.subf %69, %68 : vector<4x256xf32>
    %71 = math.exp %70 : vector<4x256xf32>
    %cst_55 = arith.constant 1.000000e+00 : f32
    %72 = vector.broadcast %cst_55 : f32 to vector<4x256xf32>
    %73 = arith.addf %72, %71 : vector<4x256xf32>
    %cst_56 = arith.constant 1.000000e+00 : f32
    %74 = vector.broadcast %cst_56 : f32 to vector<4x256xf32>
    %75 = arith.divf %74, %73 : vector<4x256xf32>
    %76 = arith.mulf %68, %75 : vector<4x256xf32>
    %c0_57 = arith.constant 0 : index
    %c0_58 = arith.constant 0 : index
    %c0_59 = arith.constant 0 : index
    %77 = vector.load %arg5[%c0_57, %c0_58, %c0_59] : memref<1x4x256xf32, #tpu.memory_space<vmem>>, vector<1x4x256xf32>
    %78 = vector.shape_cast %77 : vector<1x4x256xf32> to vector<4x256xf32>
    %79 = vector.shape_cast %76 : vector<4x256xf32> to vector<1x4x256xf32>
    tpu.vector_store %arg5[%c0_57, %c0_58, %c0_59], %79 {strides = array<i32>} : memref<1x4x256xf32, #tpu.memory_space<vmem>>, vector<1x4x256xf32>,
    return
  }
  func.func @transform_0(%arg0: i32) -> (i32, i32, i32) {
    %c0_i32 = arith.constant 0 : i32
    %c0_i32_0 = arith.constant 0 : i32
    %c0_i32_1 = arith.constant 0 : i32
    return %arg0, %c0_i32, %c0_i32_0 : i32, i32, i32
  }
  func.func @transform_1(%arg0: i32) -> (i32, i32, i32) {
    %c0_i32 = arith.constant 0 : i32
    %c0_i32_0 = arith.constant 0 : i32
    %c0_i32_1 = arith.constant 0 : i32
    %c0_i32_2 = arith.constant 0 : i32
    return %c0_i32, %c0_i32_0, %c0_i32_1 : i32, i32, i32
  }
  func.func @transform_2(%arg0: i32) -> (i32, i32, i32) {
    %c0_i32 = arith.constant 0 : i32
    %c0_i32_0 = arith.constant 0 : i32
    %c0_i32_1 = arith.constant 0 : i32
    %c0_i32_2 = arith.constant 0 : i32
    return %c0_i32, %c0_i32_0, %c0_i32_1 : i32, i32, i32
  }
  func.func @transform_3(%arg0: i32) -> (i32, i32) {
    %c0_i32 = arith.constant 0 : i32
    %c0_i32_0 = arith.constant 0 : i32
    %c0_i32_1 = arith.constant 0 : i32
    return %c0_i32, %c0_i32_0 : i32, i32
  }
  func.func @transform_4(%arg0: i32) -> (i32, i32, i32) {
    %c0_i32 = arith.constant 0 : i32
    %c0_i32_0 = arith.constant 0 : i32
    %c0_i32_1 = arith.constant 0 : i32
    return %arg0, %c0_i32, %c0_i32_0 : i32, i32, i32
  }
}

</mosaic_0001>

<llo_original>
// kernel: tpu_custom_call.1
$region0: #{tpu_custom_call.1}
  #allocation0 [shape = 'u32[]', space=smem, size = 0x4, offset = 0x4, fixed_abs, tag = 'smem constant byte address 0x4 - core index']
  #allocation1 [shape = 'u32[144,128]{1,0:T(1,128)}', space=vmem, size = 0x12000, scoped, tag = 'internal scratch']
  #allocation2 [shape = 'f32[4,290]{1,0:T(4,128)}', space=vmem, size = 0x1800, scoped, tag = 'scratch operand']
  #allocation3 [shape = 'f32[4,290]{1,0:T(4,128)}', space=vmem, size = 0x1800, scoped, tag = 'scratch operand']
  %s0 = inlined_call_operand.vmem [shape: f32[2,4,256], index: 0, kind: input, shape index: {}]
  %s1 = inlined_call_operand.vmem [shape: f32[9,4,4], index: 1, kind: input, shape index: {}]
  %s2 = inlined_call_operand.vmem [shape: f32[1,4,1], index: 2, kind: input, shape index: {}]
  %s3 = inlined_call_operand.vmem [shape: f32[2,256], index: 3, kind: input, shape index: {}]
  %s4 = inlined_call_operand.hbm [shape: f32[2,4,256], index: 4, kind: output, shape index: {}]
  %s5 = sld [smem:[#allocation0]]
  $region49: #{tpu_custom_call.1} parent=0
    _
  %s7 = ssub.s32 1, %s5
  %s8 = scalar_select 0, %s7, %s5
  $region1: #{tpu_custom_call.1} parent=0
    #allocation4 [shape = 'u8[8192]{0}', space=vmem, size = 0x2000, scoped, tag = 'output window, operand 0']
    #allocation5 [shape = 's32[2]{0}', space=sflag, size = 0x8, scoped, tag = 'scoped memory for tpu_custom_call.1']
    %9 = vsyncpa [#allocation5], 0
    %s10 = scalar_lea.sflag [#allocation5], 1
    %11 = vsyncpa %s10, 0
    loop: start=0, step=1, limit=4
    $region2: #{tpu_custom_call.1} parent=1 // loop_pre_header
      _
    $region3: #{tpu_custom_call.1} parent=1 // loop_header
      %s13 = sphi 0, %s17
      %p14 = scmp.ge.s32.totalorder %s13, 4
      %s23 = sphi 0, %s25
      %s26 = sphi 0, %s23
      %s27 = sphi 0, %s26
      %s43 = sphi 0, %s27
      %s47 = sphi 0, %s47
      %s49 = sphi 0, %s47
      %s50 = sphi 0, %s49
      %s64 = sphi 0, %s50
      %s68 = sphi 0, %s68
      %s70 = sphi 0, %s68
      %s71 = sphi 0, %s70
      %s85 = sphi 0, %s71
      %s89 = sphi 0, %s89
      %s91 = sphi 0, %s89
      %s92 = sphi 0, %s91
      %s106 = sphi 0, %s92
      %s112 = sphi 0, %s114
      %s115 = sphi 0, %s112
      %s116 = sphi 0, %s115
      %s132 = sphi 0, %s116
    $region4: #{tpu_custom_call.1} parent=1 // loop_header_branch
      %16 = sbr.rel (%p14) target = $region8
    $region5: #{tpu_custom_call.1} parent=1 // loop_body
      %s18 = ssub.s32 %s13, 1
      %s19 = ssub.s32 %s13, 2
      %s20 = sadd.s32 %s13, 1
      %s21 = ssub.s32 %s13, %s20
      %p22 = scmp.eq.s32.totalorder %s21, 0
      %s24 = sadd.s32 %s23, 1
      %s25 = scalar_select %p22, %s23, %s24
      %p28 = pneg %p22
      %p29 = scmp.eq.s32.totalorder %s13, 1
      %p30 = por %p28, %p29
      %p31 = scmp.ne.s32.totalorder %s23, %s26
      %p32 = scmp.eq.s32.totalorder %s13, 0
      %p33 = por %p31, %p32
      %p34 = scmp.ne.s32.totalorder %s23, %s26
      %p35 = scmp.eq.s32.totalorder %s18, 1
      %p36 = por %p34, %p35
      %p37 = scmp.ne.s32.totalorder %s26, %s27
      %p38 = scmp.eq.s32.totalorder %s18, 0
      %p39 = por %p37, %p38
      %p40 = scmp.ne.s32.totalorder %s26, %s27
      %p41 = scmp.eq.s32.totalorder %s19, 1
      %p42 = por %p40, %p41
      %p44 = scmp.ne.s32.totalorder %s27, %s43
      %p45 = scmp.eq.s32.totalorder %s19, 0
      %p46 = por %p44, %p45
      %s48 = sadd.s32 %s47, 1
      %p51 = scmp.eq.s32.totalorder %s13, 1
      %p52 = scmp.ne.s32.totalorder %s47, %s49
      %p53 = scmp.eq.s32.totalorder %s13, 0
      %p54 = por %p52, %p53
      %p55 = scmp.ne.s32.totalorder %s47, %s49
      %p56 = scmp.eq.s32.totalorder %s18, 1
      %p57 = por %p55, %p56
      %p58 = scmp.ne.s32.totalorder %s49, %s50
      %p59 = scmp.eq.s32.totalorder %s18, 0
      %p60 = por %p58, %p59
      %p61 = scmp.ne.s32.totalorder %s49, %s50
      %p62 = scmp.eq.s32.totalorder %s19, 1
      %p63 = por %p61, %p62
      %p65 = scmp.ne.s32.totalorder %s50, %s64
      %p66 = scmp.eq.s32.totalorder %s19, 0
      %p67 = por %p65, %p66
      %s69 = sadd.s32 %s68, 1
      %p72 = scmp.eq.s32.totalorder %s13, 1
      %p73 = scmp.ne.s32.totalorder %s68, %s70
      %p74 = scmp.eq.s32.totalorder %s13, 0
      %p75 = por %p73, %p74
      %p76 = scmp.ne.s32.totalorder %s68, %s70
      %p77 = scmp.eq.s32.totalorder %s18, 1
      %p78 = por %p76, %p77
      %p79 = scmp.ne.s32.totalorder %s70, %s71
      %p80 = scmp.eq.s32.totalorder %s18, 0
      %p81 = por %p79, %p80
      %p82 = scmp.ne.s32.totalorder %s70, %s71
      %p83 = scmp.eq.s32.totalorder %s19, 1
      %p84 = por %p82, %p83
      %p86 = scmp.ne.s32.totalorder %s71, %s85
      %p87 = scmp.eq.s32.totalorder %s19, 0
      %p88 = por %p86, %p87
      %s90 = sadd.s32 %s89, 1
      %p93 = scmp.eq.s32.totalorder %s13, 1
      %p94 = scmp.ne.s32.totalorder %s89, %s91
      %p95 = scmp.eq.s32.totalorder %s13, 0
      %p96 = por %p94, %p95
      %p97 = scmp.ne.s32.totalorder %s89, %s91
      %p98 = scmp.eq.s32.totalorder %s18, 1
      %p99 = por %p97, %p98
      %p100 = scmp.ne.s32.totalorder %s91, %s92
      %p101 = scmp.eq.s32.totalorder %s18, 0
      %p102 = por %p100, %p101
      %p103 = scmp.ne.s32.totalorder %s91, %s92
      %p104 = scmp.eq.s32.totalorder %s19, 1
      %p105 = por %p103, %p104
      %p107 = scmp.ne.s32.totalorder %s92, %s106
      %p108 = scmp.eq.s32.totalorder %s19, 0
      %p109 = por %p107, %p108
      %s110 = ssub.s32 %s13, %s20
      %p111 = scmp.eq.s32.totalorder %s110, 0
      %s113 = sadd.s32 %s112, 1
      %s114 = scalar_select %p111, %s112, %s113
      %p117 = pneg %p111
      %p118 = scmp.eq.s32.totalorder %s13, 1
      %p119 = por %p117, %p118
      %p120 = scmp.ne.s32.totalorder %s112, %s115
      %p121 = scmp.eq.s32.totalorder %s13, 0
      %p122 = por %p120, %p121
      %p123 = scmp.ne.s32.totalorder %s112, %s115
      %p124 = scmp.eq.s32.totalorder %s18, 1
      %p125 = por %p123, %p124
      %p126 = scmp.ne.s32.totalorder %s115, %s116
      %p127 = scmp.eq.s32.totalorder %s18, 0
      %p128 = por %p126, %p127
      %p129 = scmp.ne.s32.totalorder %s115, %s116
      %p130 = scmp.eq.s32.totalorder %s19, 1
      %p131 = por %p129, %p130
      %p133 = scmp.ne.s32.totalorder %s116, %s132
      %p134 = scmp.eq.s32.totalorder %s19, 0
      %p135 = por %p133, %p134
      %p136 = scmp.le.s32.totalorder 1, %s13
      %p137 = scmp.lt.s32.totalorder %s13, 3
      %p138 = pnand %p136, %p137
      %p139 = pneg %p138
      // Predicated region
      $region9: #{tpu_custom_call.1} parent=5 // pred_check
        _
      $region10: #{tpu_custom_call.1} parent=5 // pred_check_branch
        %141 = sbr.rel (%p138) target = $region12
      $region11: #{tpu_custom_call.1} parent=5 // pred_region
        %s142 = ssub.s32 %s13, 1
        // Predicated region
        $region13: #{tpu_custom_call.1} parent=11 // pred_check
          %p143 = pneg %p60
        $region14: #{tpu_custom_call.1} parent=11 // pred_check_branch
          %145 = sbr.rel (%p143) target = $region16
        $region15: #{tpu_custom_call.1} parent=11 // pred_region
          _
        $region16: #{tpu_custom_call.1} parent=11 // pred_fallthru
          _
        // Predicated region
        $region17: #{tpu_custom_call.1} parent=11 // pred_check
          %p146 = pneg %p81
        $region18: #{tpu_custom_call.1} parent=11 // pred_check_branch
          %148 = sbr.rel (%p146) target = $region20
        $region19: #{tpu_custom_call.1} parent=11 // pred_region
          _
        $region20: #{tpu_custom_call.1} parent=11 // pred_fallthru
          _
        // Predicated region
        $region21: #{tpu_custom_call.1} parent=11 // pred_check
          %p149 = pneg %p102
        $region22: #{tpu_custom_call.1} parent=11 // pred_check_branch
          %151 = sbr.rel (%p149) target = $region24
        $region23: #{tpu_custom_call.1} parent=11 // pred_region
          _
        $region24: #{tpu_custom_call.1} parent=11 // pred_fallthru
          _
      $region12: #{tpu_custom_call.1} parent=5 // pred_fallthru
        _
      %p152 = scmp.lt.s32.totalorder %s13, 2
      // Predicated region
      $region25: #{tpu_custom_call.1} parent=5 // pred_check
        %p153 = pneg %p152
      $region26: #{tpu_custom_call.1} parent=5 // pred_check_branch
        %155 = sbr.rel (%p153) target = $region28
      $region27: #{tpu_custom_call.1} parent=5 // pred_region
        // Predicated region
        $region29: #{tpu_custom_call.1} parent=27 // pred_check
          %p156 = pneg %p33
        $region30: #{tpu_custom_call.1} parent=27 // pred_check_branch
          %158 = sbr.rel (%p156) target = $region32
        $region31: #{tpu_custom_call.1} parent=27 // pred_region
          %p159 = scmp.lt.s32.totalorder %s13, 1
          %s160 = scalar_select %p159, %s13, 1
          %s161 = smul.addr %s160, 2
          %s162 = smul.addr %s161, 4
          %s163 = scalar_lea.vmem %s0, %s162
        $region32: #{tpu_custom_call.1} parent=27 // pred_fallthru
          _
      $region28: #{tpu_custom_call.1} parent=5 // pred_fallthru
        _
      %p164 = scmp.le.s32.totalorder 1, %s13
      %p165 = scmp.lt.s32.totalorder %s13, 3
      %p166 = pnand %p164, %p165
      %p167 = pneg %p166
      // Predicated region
      $region33: #{tpu_custom_call.1} parent=5 // pred_check
        _
      $region34: #{tpu_custom_call.1} parent=5 // pred_check_branch
        %169 = sbr.rel (%p166) target = $region36
      $region35: #{tpu_custom_call.1} parent=5 // pred_region
        %s170 = ssub.s32 %s13, 1
        %p171 = scmp.lt.s32.totalorder %s18, 1
        %s172 = scalar_select %p171, %s18, 1
        %s173 = smul.addr %s172, 2
        %s174 = smul.addr %s173, 4
        %s175 = scalar_lea.vmem %s0, %s174
        %p176 = pneg %p39
        %p177 = pneg %p36
        %p178 = pneg %p60
        %p179 = pneg %p57
        %p180 = pneg %p81
        %p181 = pneg %p78
        %p182 = pneg %p102
        %p183 = pneg %p99
        %p184 = pneg %p128
        %p185 = pneg %p125
        %s186 = sand.u32 %s115, 1
        %s187 = scalar_lea.sflag [#allocation5], %s186
        %s188 = sand.u32 %s115, 1
        %s189 = smul.addr %s188, 8
        %s190 = scalar_lea.vmem [#allocation4], %s189
        %p191 = scmp.lt.s32.totalorder %s18, 1
        %s192 = scalar_select %p191, %s18, 1
        %s193 = smul.addr %s192, 2
        %s194 = smul.addr %s193, 4
        %s195 = scalar_lea.vmem %s0, %s194
        %196 = vst [vmem:[#allocation2] sm:$0xff] 0.0
        %vm197 = vcmask 273408
        %198 = vst.msk [vmem:[#allocation2 + $0x8] sm:$0xf] %vm197, 0.0
        %v199 = vld [vmem:[%s195] sm:$0xff]
        %201 = vrot.lane.b32.xlu0 %v199, 17
        %v202 = vpop.permute.xlu0 %201
        %v203 = vrot.slane %v202, 4
        %vm204 = vcmask 138240
        %v205 = vsel %vm204, %v203, %v202
        %vm208 = vcmask 1043592
        %vm209 = vcmask 1047556
        %vm210 = vmor %vm209, %vm208
        %211 = vst.msk [vmem:[#allocation2] sm:$0xff] %vm210, %v205
        %vm212 = vcmask 134144
        %213 = vst.msk [vmem:[#allocation2 + $0x8] sm:$0xf] %vm212, %v203
        %v214 = vld [vmem:[%s3] ss:$2 sm:$0x3]
        %s215 = scalar_lea.vmem %s3, 1
        %v216 = vld [vmem:[%s215] ss:$2 sm:$0x3]
        %v217 = vld [vmem:[#allocation2] sm:$0xff]
        %v219 = vlaneseq
        %v220 = vshrl.u32 %v219, 7
        %v221 = vsub.s32 0, %v220
        %v222 = vrot.slane %v214, %v221
        %v223 = vlaneseq
        %v224 = vshrl.u32 %v223, 7
        %v225 = vsub.s32 1, %v224
        %v226 = vrot.slane %v214, %v225
        %v227 = vcombine.low %v222, %v226
        %v229 = vmul.f32 %v217, %v227
        %v230 = vld [vmem:[%s1] sm:$0xf]
        %v231 = vld [vmem:[#allocation2 + $0x8] sm:$0xf]
        %s232 = scalar_lea.vmem %s1, 4
        %v233 = vld [vmem:[%s232] sm:$0xf]
        %v236 = vcombine.high %v217, %v217
        %237 = vrot.lane.b32.xlu0 %v217, 127
        %v238 = vpop.permute.xlu0 %237
        %239 = vrot.lane.b32.xlu0 %v236, 127
        %v240 = vpop.permute.xlu0 %239
        %241 = vrot.lane.b32.xlu0 %v231, 127
        %v242 = vpop.permute.xlu0 %241
        %vm243 = vcmask 1039360
        %v244 = vsel %vm243, %v238, %v240
        %v245 = vsel %vm243, %v240, %v242
        %vm246 = vcmask 31744
        %v248 = vsel %vm246, %v233, 0
        %vm250 = vcmask 1043456
        %v251 = vsel %vm250, %v244, 0
        %v253 = vsel %vm250, %v245, 0
        %255 = vmatprep.subr.mxu0 %v253
        %256 = vmatpush1.msra.mxu0 %v251
        %257 = vmatprep.subr.mxu0 0.0
        %258 = vmatpush1.msra.mxu0 0.0
        %259 = vmatprep.subr.mxu0 0.0
        %260 = vmatpush1.msra.mxu0 0.0
        %261 = vmatprep.subr.mxu0 0.0
        %262 = vmatpush1.msra.mxu0 0.0
        %263 = vmatprep.subr.mxu0 0.0
        %264 = vmatpush1.msra.mxu0 0.0
        %265 = vmatprep.subr.mxu0 0.0
        %266 = vmatpush1.msra.mxu0 0.0
        %267 = vmatprep.subr.mxu0 0.0
        %268 = vmatpush1.msra.mxu0 0.0
        %269 = vmatprep.subr.mxu0 0.0
        %270 = vmatpush1.msra.mxu0 0.0
        %271 = vmatprep.subr.mxu0 0.0
        %272 = vmatpush1.msra.mxu0 0.0
        %273 = vmatprep.subr.mxu0 0.0
        %274 = vmatpush1.msra.mxu0 0.0
        %275 = vmatprep.subr.mxu0 0.0
        %276 = vmatpush1.msra.mxu0 0.0
        %277 = vmatprep.subr.mxu0 0.0
        %278 = vmatpush1.msra.mxu0 0.0
        %279 = vmatprep.subr.mxu0 0.0
        %280 = vmatpush1.msra.mxu0 0.0
        %281 = vmatprep.subr.mxu0 0.0
        %282 = vmatpush1.msra.mxu0 0.0
        %283 = vmatprep.subr.mxu0 0.0
        %284 = vmatpush1.msra.mxu0 0.0
        %285 = vmatprep.subr.mxu0 0.0
        %286 = vmatpush1.msra.mxu0 0.0
        %287 = vmatprep.subr.mxu0 0.0
        %288 = vmatpush1.msra.mxu0 0.0
        %289 = vmatprep.subr.mxu0 0.0
        %290 = vmatpush1.msra.mxu0 0.0
        %291 = vmatprep.subr.mxu0 0.0
        %292 = vmatpush1.msra.mxu0 0.0
        %293 = vmatprep.subr.mxu0 0.0
        %294 = vmatpush1.msra.mxu0 0.0
        %295 = vmatprep.subr.mxu0 0.0
        %296 = vmatpush1.msra.mxu0 0.0
        %297 = vmatprep.subr.mxu0 0.0
        %298 = vmatpush1.msra.mxu0 0.0
        %299 = vmatprep.subr.mxu0 0.0
        %300 = vmatpush1.msra.mxu0 0.0
        %301 = vmatprep.subr.mxu0 0.0
        %302 = vmatpush1.msra.mxu0 0.0
        %303 = vmatprep.subr.mxu0 0.0
        %304 = vmatpush1.msra.mxu0 0.0
        %305 = vmatprep.subr.mxu0 0.0
        %306 = vmatpush1.msra.mxu0 0.0
        %307 = vmatprep.subr.mxu0 0.0
        %308 = vmatpush1.msra.mxu0 0.0
        %309 = vmatprep.subr.mxu0 0.0
        %310 = vmatpush1.msra.mxu0 0.0
        %311 = vmatprep.subr.mxu0 0.0
        %312 = vmatpush1.msra.mxu0 0.0
        %313 = vmatprep.subr.mxu0 0.0
        %314 = vmatpush1.msra.mxu0 0.0
        %315 = vmatprep.subr.mxu0 0.0
        %316 = vmatpush1.msra.mxu0 0.0
        %317 = vmatprep.subr.mxu0 0.0
        %318 = vmatpush1.msra.mxu0 0.0
        %319 = vmatprep.mubr.f32.mxu0 0.0
        %320 = vmatmul.mubr.f32.gmra.mrb[0].mxu0 %v248
        %v321 = vpop.f32.mrb[0].mxu0
        %v322 = vadd.f32 0.0, %v321
        %v323 = vpop.f32.mrb[0].mxu0
        %v324 = vadd.f32 0.0, %v323
        %325 = vdwg.mxu0
        %v327 = vcombine.high %v229, %v229
        %v329 = vsel %vm246, %v230, 0
        %v331 = vsel %vm250, %v229, 0
        %v333 = vsel %vm250, %v327, 0
        %335 = vmatprep.subr.mxu0 %v333
        %336 = vmatpush1.msra.mxu0 %v331
        %337 = vmatprep.subr.mxu0 0.0
        %338 = vmatpush1.msra.mxu0 0.0
        %339 = vmatprep.subr.mxu0 0.0
        %340 = vmatpush1.msra.mxu0 0.0
        %341 = vmatprep.subr.mxu0 0.0
        %342 = vmatpush1.msra.mxu0 0.0
        %343 = vmatprep.subr.mxu0 0.0
        %344 = vmatpush1.msra.mxu0 0.0
        %345 = vmatprep.subr.mxu0 0.0
        %346 = vmatpush1.msra.mxu0 0.0
        %347 = vmatprep.subr.mxu0 0.0
        %348 = vmatpush1.msra.mxu0 0.0
        %349 = vmatprep.subr.mxu0 0.0
        %350 = vmatpush1.msra.mxu0 0.0
        %351 = vmatprep.subr.mxu0 0.0
        %352 = vmatpush1.msra.mxu0 0.0
        %353 = vmatprep.subr.mxu0 0.0
        %354 = vmatpush1.msra.mxu0 0.0
        %355 = vmatprep.subr.mxu0 0.0
        %356 = vmatpush1.msra.mxu0 0.0
        %357 = vmatprep.subr.mxu0 0.0
        %358 = vmatpush1.msra.mxu0 0.0
        %359 = vmatprep.subr.mxu0 0.0
        %360 = vmatpush1.msra.mxu0 0.0
        %361 = vmatprep.subr.mxu0 0.0
        %362 = vmatpush1.msra.mxu0 0.0
        %363 = vmatprep.subr.mxu0 0.0
        %364 = vmatpush1.msra.mxu0 0.0
        %365 = vmatprep.subr.mxu0 0.0
        %366 = vmatpush1.msra.mxu0 0.0
        %367 = vmatprep.subr.mxu0 0.0
        %368 = vmatpush1.msra.mxu0 0.0
        %369 = vmatprep.subr.mxu0 0.0
        %370 = vmatpush1.msra.mxu0 0.0
        %371 = vmatprep.subr.mxu0 0.0
        %372 = vmatpush1.msra.mxu0 0.0
        %373 = vmatprep.subr.mxu0 0.0
        %374 = vmatpush1.msra.mxu0 0.0
        %375 = vmatprep.subr.mxu0 0.0
        %376 = vmatpush1.msra.mxu0 0.0
        %377 = vmatprep.subr.mxu0 0.0
        %378 = vmatpush1.msra.mxu0 0.0
        %379 = vmatprep.subr.mxu0 0.0
        %380 = vmatpush1.msra.mxu0 0.0
        %381 = vmatprep.subr.mxu0 0.0
        %382 = vmatpush1.msra.mxu0 0.0
        %383 = vmatprep.subr.mxu0 0.0
        %384 = vmatpush1.msra.mxu0 0.0
        %385 = vmatprep.subr.mxu0 0.0
        %386 = vmatpush1.msra.mxu0 0.0
        %387 = vmatprep.subr.mxu0 0.0
        %388 = vmatpush1.msra.mxu0 0.0
        %389 = vmatprep.subr.mxu0 0.0
        %390 = vmatpush1.msra.mxu0 0.0
        %391 = vmatprep.subr.mxu0 0.0
        %392 = vmatpush1.msra.mxu0 0.0
        %393 = vmatprep.subr.mxu0 0.0
        %394 = vmatpush1.msra.mxu0 0.0
        %395 = vmatprep.subr.mxu0 0.0
        %396 = vmatpush1.msra.mxu0 0.0
        %397 = vmatprep.subr.mxu0 0.0
        %398 = vmatpush1.msra.mxu0 0.0
        %399 = vmatprep.mubr.f32.mxu0 0.0
        %400 = vmatmul.mubr.f32.gmra.mrb[0].mxu0 %v329
        %v401 = vpop.f32.mrb[0].mxu0
        %v402 = vadd.f32 %v322, %v401
        %v403 = vpop.f32.mrb[0].mxu0
        %v404 = vadd.f32 %v324, %v403
        %405 = vdwg.mxu0
        %v406 = vld [vmem:[#allocation2] sm:$0xff]
        %v407 = vld [vmem:[#allocation2 + $0x8] sm:$0xf]
        %v409 = vlaneseq
        %v410 = vshrl.u32 %v409, 7
        %v411 = vsub.s32 0, %v410
        %v412 = vrot.slane %v216, %v411
        %v413 = vlaneseq
        %v414 = vshrl.u32 %v413, 7
        %v415 = vsub.s32 1, %v414
        %v416 = vrot.slane %v216, %v415
        %v417 = vcombine.low %v412, %v416
        %418 = vrot.lane.b32.xlu0 %v417, 2
        %v419 = vpop.permute.xlu0 %418
        %v420 = vrot.slane %v419, 4
        %vm421 = vcmask 15360
        %v422 = vsel %vm421, %v420, %v419
        %v425 = vmul.f32 %v406, %v422
        %v426 = vmul.f32 %v407, %v420
        %s427 = scalar_lea.vmem %s1, 8
        %v428 = vld [vmem:[%s427] sm:$0xf]
        %v431 = vcombine.high %v425, %v425
        %432 = vrot.lane.b32.xlu0 %v425, 126
        %v433 = vpop.permute.xlu0 %432
        %434 = vrot.lane.b32.xlu0 %v431, 126
        %v435 = vpop.permute.xlu0 %434
        %436 = vrot.lane.b32.xlu0 %v426, 126
        %v437 = vpop.permute.xlu0 %436
        %vm438 = vcmask 1031168
        %v439 = vsel %vm438, %v433, %v435
        %v440 = vsel %vm438, %v435, %v437
        %v442 = vsel %vm246, %v428, 0
        %v444 = vsel %vm250, %v439, 0
        %v446 = vsel %vm250, %v440, 0
        %448 = vmatprep.subr.mxu0 %v446
        %449 = vmatpush1.msra.mxu0 %v444
        %450 = vmatprep.subr.mxu0 0.0
        %451 = vmatpush1.msra.mxu0 0.0
        %452 = vmatprep.subr.mxu0 0.0
        %453 = vmatpush1.msra.mxu0 0.0
        %454 = vmatprep.subr.mxu0 0.0
        %455 = vmatpush1.msra.mxu0 0.0
        %456 = vmatprep.subr.mxu0 0.0
        %457 = vmatpush1.msra.mxu0 0.0
        %458 = vmatprep.subr.mxu0 0.0
        %459 = vmatpush1.msra.mxu0 0.0
        %460 = vmatprep.subr.mxu0 0.0
        %461 = vmatpush1.msra.mxu0 0.0
        %462 = vmatprep.subr.mxu0 0.0
        %463 = vmatpush1.msra.mxu0 0.0
        %464 = vmatprep.subr.mxu0 0.0
        %465 = vmatpush1.msra.mxu0 0.0
        %466 = vmatprep.subr.mxu0 0.0
        %467 = vmatpush1.msra.mxu0 0.0
        %468 = vmatprep.subr.mxu0 0.0
        %469 = vmatpush1.msra.mxu0 0.0
        %470 = vmatprep.subr.mxu0 0.0
        %471 = vmatpush1.msra.mxu0 0.0
        %472 = vmatprep.subr.mxu0 0.0
        %473 = vmatpush1.msra.mxu0 0.0
        %474 = vmatprep.subr.mxu0 0.0
        %475 = vmatpush1.msra.mxu0 0.0
        %476 = vmatprep.subr.mxu0 0.0
        %477 = vmatpush1.msra.mxu0 0.0
        %478 = vmatprep.subr.mxu0 0.0
        %479 = vmatpush1.msra.mxu0 0.0
        %480 = vmatprep.subr.mxu0 0.0
        %481 = vmatpush1.msra.mxu0 0.0
        %482 = vmatprep.subr.mxu0 0.0
        %483 = vmatpush1.msra.mxu0 0.0
        %484 = vmatprep.subr.mxu0 0.0
        %485 = vmatpush1.msra.mxu0 0.0
        %486 = vmatprep.subr.mxu0 0.0
        %487 = vmatpush1.msra.mxu0 0.0
        %488 = vmatprep.subr.mxu0 0.0
        %489 = vmatpush1.msra.mxu0 0.0
        %490 = vmatprep.subr.mxu0 0.0
        %491 = vmatpush1.msra.mxu0 0.0
        %492 = vmatprep.subr.mxu0 0.0
        %493 = vmatpush1.msra.mxu0 0.0
        %494 = vmatprep.subr.mxu0 0.0
        %495 = vmatpush1.msra.mxu0 0.0
        %496 = vmatprep.subr.mxu0 0.0
        %497 = vmatpush1.msra.mxu0 0.0
        %498 = vmatprep.subr.mxu0 0.0
        %499 = vmatpush1.msra.mxu0 0.0
        %500 = vmatprep.subr.mxu0 0.0
        %501 = vmatpush1.msra.mxu0 0.0
        %502 = vmatprep.subr.mxu0 0.0
        %503 = vmatpush1.msra.mxu0 0.0
        %504 = vmatprep.subr.mxu0 0.0
        %505 = vmatpush1.msra.mxu0 0.0
        %506 = vmatprep.subr.mxu0 0.0
        %507 = vmatpush1.msra.mxu0 0.0
        %508 = vmatprep.subr.mxu0 0.0
        %509 = vmatpush1.msra.mxu0 0.0
        %510 = vmatprep.subr.mxu0 0.0
        %511 = vmatpush1.msra.mxu0 0.0
        %512 = vmatprep.mubr.f32.mxu0 0.0
        %513 = vmatmul.mubr.f32.gmra.mrb[0].mxu0 %v442
        %v514 = vpop.f32.mrb[0].mxu0
        %v515 = vadd.f32 0.0, %v514
        %v516 = vpop.f32.mrb[0].mxu0
        %v517 = vadd.f32 0.0, %v516
        %518 = vdwg.mxu0
        %v519 = vadd.f32 %v402, %v515
        %v520 = vadd.f32 %v404, %v517
        %v521 = vld [vmem:[#allocation2] sm:$0xff]
        %v522 = vld [vmem:[#allocation2 + $0x8] sm:$0xf]
        %523 = vrot.lane.b32.xlu0 %v227, 16
        %v524 = vpop.permute.xlu0 %523
        %v525 = vrot.slane %v524, 4
        %vm526 = vcmask 130048
        %v527 = vsel %vm526, %v525, %v524
        %v530 = vmul.f32 %v521, %v527
        %v531 = vmul.f32 %v522, %v525
        %s532 = scalar_lea.vmem %s1, 12
        %v533 = vld [vmem:[%s532] sm:$0xf]
        %v536 = vcombine.high %v530, %v530
        %537 = vrot.lane.b32.xlu0 %v530, 112
        %v538 = vpop.permute.xlu0 %537
        %539 = vrot.lane.b32.xlu0 %v536, 112
        %v540 = vpop.permute.xlu0 %539
        %541 = vrot.lane.b32.xlu0 %v531, 112
        %v542 = vpop.permute.xlu0 %541
        %vm543 = vcmask 916480
        %v544 = vsel %vm543, %v538, %v540
        %v545 = vsel %vm543, %v540, %v542
        %v547 = vsel %vm246, %v533, 0
        %v549 = vsel %vm250, %v544, 0
        %v551 = vsel %vm250, %v545, 0
        %553 = vmatprep.subr.mxu0 %v551
        %554 = vmatpush1.msra.mxu0 %v549
        %555 = vmatprep.subr.mxu0 0.0
        %556 = vmatpush1.msra.mxu0 0.0
        %557 = vmatprep.subr.mxu0 0.0
        %558 = vmatpush1.msra.mxu0 0.0
        %559 = vmatprep.subr.mxu0 0.0
        %560 = vmatpush1.msra.mxu0 0.0
        %561 = vmatprep.subr.mxu0 0.0
        %562 = vmatpush1.msra.mxu0 0.0
        %563 = vmatprep.subr.mxu0 0.0
        %564 = vmatpush1.msra.mxu0 0.0
        %565 = vmatprep.subr.mxu0 0.0
        %566 = vmatpush1.msra.mxu0 0.0
        %567 = vmatprep.subr.mxu0 0.0
        %568 = vmatpush1.msra.mxu0 0.0
        %569 = vmatprep.subr.mxu0 0.0
        %570 = vmatpush1.msra.mxu0 0.0
        %571 = vmatprep.subr.mxu0 0.0
        %572 = vmatpush1.msra.mxu0 0.0
        %573 = vmatprep.subr.mxu0 0.0
        %574 = vmatpush1.msra.mxu0 0.0
        %575 = vmatprep.subr.mxu0 0.0
        %576 = vmatpush1.msra.mxu0 0.0
        %577 = vmatprep.subr.mxu0 0.0
        %578 = vmatpush1.msra.mxu0 0.0
        %579 = vmatprep.subr.mxu0 0.0
        %580 = vmatpush1.msra.mxu0 0.0
        %581 = vmatprep.subr.mxu0 0.0
        %582 = vmatpush1.msra.mxu0 0.0
        %583 = vmatprep.subr.mxu0 0.0
        %584 = vmatpush1.msra.mxu0 0.0
        %585 = vmatprep.subr.mxu0 0.0
        %586 = vmatpush1.msra.mxu0 0.0
        %587 = vmatprep.subr.mxu0 0.0
        %588 = vmatpush1.msra.mxu0 0.0
        %589 = vmatprep.subr.mxu0 0.0
        %590 = vmatpush1.msra.mxu0 0.0
        %591 = vmatprep.subr.mxu0 0.0
        %592 = vmatpush1.msra.mxu0 0.0
        %593 = vmatprep.subr.mxu0 0.0
        %594 = vmatpush1.msra.mxu0 0.0
        %595 = vmatprep.subr.mxu0 0.0
        %596 = vmatpush1.msra.mxu0 0.0
        %597 = vmatprep.subr.mxu0 0.0
        %598 = vmatpush1.msra.mxu0 0.0
        %599 = vmatprep.subr.mxu0 0.0
        %600 = vmatpush1.msra.mxu0 0.0
        %601 = vmatprep.subr.mxu0 0.0
        %602 = vmatpush1.msra.mxu0 0.0
        %603 = vmatprep.subr.mxu0 0.0
        %604 = vmatpush1.msra.mxu0 0.0
        %605 = vmatprep.subr.mxu0 0.0
        %606 = vmatpush1.msra.mxu0 0.0
        %607 = vmatprep.subr.mxu0 0.0
        %608 = vmatpush1.msra.mxu0 0.0
        %609 = vmatprep.subr.mxu0 0.0
        %610 = vmatpush1.msra.mxu0 0.0
        %611 = vmatprep.subr.mxu0 0.0
        %612 = vmatpush1.msra.mxu0 0.0
        %613 = vmatprep.subr.mxu0 0.0
        %614 = vmatpush1.msra.mxu0 0.0
        %615 = vmatprep.subr.mxu0 0.0
        %616 = vmatpush1.msra.mxu0 0.0
        %617 = vmatprep.mubr.f32.mxu0 0.0
        %618 = vmatmul.mubr.f32.gmra.mrb[0].mxu0 %v547
        %v619 = vpop.f32.mrb[0].mxu0
        %v620 = vadd.f32 0.0, %v619
        %v621 = vpop.f32.mrb[0].mxu0
        %v622 = vadd.f32 0.0, %v621
        %623 = vdwg.mxu0
        %v624 = vadd.f32 %v519, %v620
        %v625 = vadd.f32 %v520, %v622
        %v626 = vld [vmem:[#allocation2] sm:$0xff]
        %v627 = vld [vmem:[#allocation2 + $0x8] sm:$0xf]
        %s628 = scalar_lea.vmem %s1, 16
        %v629 = vld [vmem:[%s628] sm:$0xf]
        %v632 = vcombine.high %v626, %v626
        %633 = vrot.lane.b32.xlu0 %v626, 111
        %v634 = vpop.permute.xlu0 %633
        %635 = vrot.lane.b32.xlu0 %v632, 111
        %v636 = vpop.permute.xlu0 %635
        %637 = vrot.lane.b32.xlu0 %v627, 111
        %v638 = vpop.permute.xlu0 %637
        %vm639 = vcmask 908288
        %v640 = vsel %vm639, %v634, %v636
        %v641 = vsel %vm639, %v636, %v638
        %v643 = vsel %vm246, %v629, 0
        %v645 = vsel %vm250, %v640, 0
        %v647 = vsel %vm250, %v641, 0
        %649 = vmatprep.subr.mxu0 %v647
        %650 = vmatpush1.msra.mxu0 %v645
        %651 = vmatprep.subr.mxu0 0.0
        %652 = vmatpush1.msra.mxu0 0.0
        %653 = vmatprep.subr.mxu0 0.0
        %654 = vmatpush1.msra.mxu0 0.0
        %655 = vmatprep.subr.mxu0 0.0
        %656 = vmatpush1.msra.mxu0 0.0
        %657 = vmatprep.subr.mxu0 0.0
        %658 = vmatpush1.msra.mxu0 0.0
        %659 = vmatprep.subr.mxu0 0.0
        %660 = vmatpush1.msra.mxu0 0.0
        %661 = vmatprep.subr.mxu0 0.0
        %662 = vmatpush1.msra.mxu0 0.0
        %663 = vmatprep.subr.mxu0 0.0
        %664 = vmatpush1.msra.mxu0 0.0
        %665 = vmatprep.subr.mxu0 0.0
        %666 = vmatpush1.msra.mxu0 0.0
        %667 = vmatprep.subr.mxu0 0.0
        %668 = vmatpush1.msra.mxu0 0.0
        %669 = vmatprep.subr.mxu0 0.0
        %670 = vmatpush1.msra.mxu0 0.0
        %671 = vmatprep.subr.mxu0 0.0
        %672 = vmatpush1.msra.mxu0 0.0
        %673 = vmatprep.subr.mxu0 0.0
        %674 = vmatpush1.msra.mxu0 0.0
        %675 = vmatprep.subr.mxu0 0.0
        %676 = vmatpush1.msra.mxu0 0.0
        %677 = vmatprep.subr.mxu0 0.0
        %678 = vmatpush1.msra.mxu0 0.0
        %679 = vmatprep.subr.mxu0 0.0
        %680 = vmatpush1.msra.mxu0 0.0
        %681 = vmatprep.subr.mxu0 0.0
        %682 = vmatpush1.msra.mxu0 0.0
        %683 = vmatprep.subr.mxu0 0.0
        %684 = vmatpush1.msra.mxu0 0.0
        %685 = vmatprep.subr.mxu0 0.0
        %686 = vmatpush1.msra.mxu0 0.0
        %687 = vmatprep.subr.mxu0 0.0
        %688 = vmatpush1.msra.mxu0 0.0
        %689 = vmatprep.subr.mxu0 0.0
        %690 = vmatpush1.msra.mxu0 0.0
        %691 = vmatprep.subr.mxu0 0.0
        %692 = vmatpush1.msra.mxu0 0.0
        %693 = vmatprep.subr.mxu0 0.0
        %694 = vmatpush1.msra.mxu0 0.0
        %695 = vmatprep.subr.mxu0 0.0
        %696 = vmatpush1.msra.mxu0 0.0
        %697 = vmatprep.subr.mxu0 0.0
        %698 = vmatpush1.msra.mxu0 0.0
        %699 = vmatprep.subr.mxu0 0.0
        %700 = vmatpush1.msra.mxu0 0.0
        %701 = vmatprep.subr.mxu0 0.0
        %702 = vmatpush1.msra.mxu0 0.0
        %703 = vmatprep.subr.mxu0 0.0
        %704 = vmatpush1.msra.mxu0 0.0
        %705 = vmatprep.subr.mxu0 0.0
        %706 = vmatpush1.msra.mxu0 0.0
        %707 = vmatprep.subr.mxu0 0.0
        %708 = vmatpush1.msra.mxu0 0.0
        %709 = vmatprep.subr.mxu0 0.0
        %710 = vmatpush1.msra.mxu0 0.0
        %711 = vmatprep.subr.mxu0 0.0
        %712 = vmatpush1.msra.mxu0 0.0
        %713 = vmatprep.mubr.f32.mxu0 0.0
        %714 = vmatmul.mubr.f32.gmra.mrb[0].mxu0 %v643
        %v715 = vpop.f32.mrb[0].mxu0
        %v716 = vadd.f32 0.0, %v715
        %v717 = vpop.f32.mrb[0].mxu0
        %v718 = vadd.f32 0.0, %v717
        %719 = vdwg.mxu0
        %v720 = vadd.f32 %v624, %v716
        %v721 = vadd.f32 %v625, %v718
        %v722 = vld [vmem:[#allocation2] sm:$0xff]
        %v723 = vld [vmem:[#allocation2 + $0x8] sm:$0xf]
        %724 = vrot.lane.b32.xlu0 %v417, 18
        %v725 = vpop.permute.xlu0 %724
        %v726 = vrot.slane %v725, 4
        %vm727 = vcmask 146432
        %v728 = vsel %vm727, %v726, %v725
        %v731 = vmul.f32 %v722, %v728
        %v732 = vmul.f32 %v723, %v726
        %s733 = scalar_lea.vmem %s1, 20
        %v734 = vld [vmem:[%s733] sm:$0xf]
        %v737 = vcombine.high %v731, %v731
        %738 = vrot.lane.b32.xlu0 %v731, 110
        %v739 = vpop.permute.xlu0 %738
        %740 = vrot.lane.b32.xlu0 %v737, 110
        %v741 = vpop.permute.xlu0 %740
        %742 = vrot.lane.b32.xlu0 %v732, 110
        %v743 = vpop.permute.xlu0 %742
        %vm744 = vcmask 900096
        %v745 = vsel %vm744, %v739, %v741
        %v746 = vsel %vm744, %v741, %v743
        %v748 = vsel %vm246, %v734, 0
        %v750 = vsel %vm250, %v745, 0
        %v752 = vsel %vm250, %v746, 0
        %754 = vmatprep.subr.mxu0 %v752
        %755 = vmatpush1.msra.mxu0 %v750
        %756 = vmatprep.subr.mxu0 0.0
        %757 = vmatpush1.msra.mxu0 0.0
        %758 = vmatprep.subr.mxu0 0.0
        %759 = vmatpush1.msra.mxu0 0.0
        %760 = vmatprep.subr.mxu0 0.0
        %761 = vmatpush1.msra.mxu0 0.0
        %762 = vmatprep.subr.mxu0 0.0
        %763 = vmatpush1.msra.mxu0 0.0
        %764 = vmatprep.subr.mxu0 0.0
        %765 = vmatpush1.msra.mxu0 0.0
        %766 = vmatprep.subr.mxu0 0.0
        %767 = vmatpush1.msra.mxu0 0.0
        %768 = vmatprep.subr.mxu0 0.0
        %769 = vmatpush1.msra.mxu0 0.0
        %770 = vmatprep.subr.mxu0 0.0
        %771 = vmatpush1.msra.mxu0 0.0
        %772 = vmatprep.subr.mxu0 0.0
        %773 = vmatpush1.msra.mxu0 0.0
        %774 = vmatprep.subr.mxu0 0.0
        %775 = vmatpush1.msra.mxu0 0.0
        %776 = vmatprep.subr.mxu0 0.0
        %777 = vmatpush1.msra.mxu0 0.0
        %778 = vmatprep.subr.mxu0 0.0
        %779 = vmatpush1.msra.mxu0 0.0
        %780 = vmatprep.subr.mxu0 0.0
        %781 = vmatpush1.msra.mxu0 0.0
        %782 = vmatprep.subr.mxu0 0.0
        %783 = vmatpush1.msra.mxu0 0.0
        %784 = vmatprep.subr.mxu0 0.0
        %785 = vmatpush1.msra.mxu0 0.0
        %786 = vmatprep.subr.mxu0 0.0
        %787 = vmatpush1.msra.mxu0 0.0
        %788 = vmatprep.subr.mxu0 0.0
        %789 = vmatpush1.msra.mxu0 0.0
        %790 = vmatprep.subr.mxu0 0.0
        %791 = vmatpush1.msra.mxu0 0.0
        %792 = vmatprep.subr.mxu0 0.0
        %793 = vmatpush1.msra.mxu0 0.0
        %794 = vmatprep.subr.mxu0 0.0
        %795 = vmatpush1.msra.mxu0 0.0
        %796 = vmatprep.subr.mxu0 0.0
        %797 = vmatpush1.msra.mxu0 0.0
        %798 = vmatprep.subr.mxu0 0.0
        %799 = vmatpush1.msra.mxu0 0.0
        %800 = vmatprep.subr.mxu0 0.0
        %801 = vmatpush1.msra.mxu0 0.0
        %802 = vmatprep.subr.mxu0 0.0
        %803 = vmatpush1.msra.mxu0 0.0
        %804 = vmatprep.subr.mxu0 0.0
        %805 = vmatpush1.msra.mxu0 0.0
        %806 = vmatprep.subr.mxu0 0.0
        %807 = vmatpush1.msra.mxu0 0.0
        %808 = vmatprep.subr.mxu0 0.0
        %809 = vmatpush1.msra.mxu0 0.0
        %810 = vmatprep.subr.mxu0 0.0
        %811 = vmatpush1.msra.mxu0 0.0
        %812 = vmatprep.subr.mxu0 0.0
        %813 = vmatpush1.msra.mxu0 0.0
        %814 = vmatprep.subr.mxu0 0.0
        %815 = vmatpush1.msra.mxu0 0.0
        %816 = vmatprep.subr.mxu0 0.0
        %817 = vmatpush1.msra.mxu0 0.0
        %818 = vmatprep.mubr.f32.mxu0 0.0
        %819 = vmatmul.mubr.f32.gmra.mrb[0].mxu0 %v748
        %v820 = vpop.f32.mrb[0].mxu0
        %v821 = vadd.f32 0.0, %v820
        %v822 = vpop.f32.mrb[0].mxu0
        %v823 = vadd.f32 0.0, %v822
        %824 = vdwg.mxu0
        %v825 = vadd.f32 %v720, %v821
        %v826 = vadd.f32 %v721, %v823
        %v827 = vld [vmem:[#allocation2] sm:$0xff]
        %v828 = vld [vmem:[#allocation2 + $0x8] sm:$0xf]
        %829 = vrot.lane.b32.xlu0 %v227, 32
        %v830 = vpop.permute.xlu0 %829
        %v831 = vrot.slane %v830, 4
        %vm832 = vcmask 261120
        %v833 = vsel %vm832, %v831, %v830
        %v836 = vmul.f32 %v827, %v833
        %v837 = vmul.f32 %v828, %v831
        %s838 = scalar_lea.vmem %s1, 24
        %v839 = vld [vmem:[%s838] sm:$0xf]
        %v842 = vcombine.high %v836, %v836
        %843 = vrot.lane.b32.xlu0 %v836, 96
        %v844 = vpop.permute.xlu0 %843
        %845 = vrot.lane.b32.xlu0 %v842, 96
        %v846 = vpop.permute.xlu0 %845
        %847 = vrot.lane.b32.xlu0 %v837, 96
        %v848 = vpop.permute.xlu0 %847
        %vm849 = vcmask 785408
        %v850 = vsel %vm849, %v844, %v846
        %v851 = vsel %vm849, %v846, %v848
        %v853 = vsel %vm246, %v839, 0
        %v855 = vsel %vm250, %v850, 0
        %v857 = vsel %vm250, %v851, 0
        %859 = vmatprep.subr.mxu0 %v857
        %860 = vmatpush1.msra.mxu0 %v855
        %861 = vmatprep.subr.mxu0 0.0
        %862 = vmatpush1.msra.mxu0 0.0
        %863 = vmatprep.subr.mxu0 0.0
        %864 = vmatpush1.msra.mxu0 0.0
        %865 = vmatprep.subr.mxu0 0.0
        %866 = vmatpush1.msra.mxu0 0.0
        %867 = vmatprep.subr.mxu0 0.0
        %868 = vmatpush1.msra.mxu0 0.0
        %869 = vmatprep.subr.mxu0 0.0
        %870 = vmatpush1.msra.mxu0 0.0
        %871 = vmatprep.subr.mxu0 0.0
        %872 = vmatpush1.msra.mxu0 0.0
        %873 = vmatprep.subr.mxu0 0.0
        %874 = vmatpush1.msra.mxu0 0.0
        %875 = vmatprep.subr.mxu0 0.0
        %876 = vmatpush1.msra.mxu0 0.0
        %877 = vmatprep.subr.mxu0 0.0
        %878 = vmatpush1.msra.mxu0 0.0
        %879 = vmatprep.subr.mxu0 0.0
        %880 = vmatpush1.msra.mxu0 0.0
        %881 = vmatprep.subr.mxu0 0.0
        %882 = vmatpush1.msra.mxu0 0.0
        %883 = vmatprep.subr.mxu0 0.0
        %884 = vmatpush1.msra.mxu0 0.0
        %885 = vmatprep.subr.mxu0 0.0
        %886 = vmatpush1.msra.mxu0 0.0
        %887 = vmatprep.subr.mxu0 0.0
        %888 = vmatpush1.msra.mxu0 0.0
        %889 = vmatprep.subr.mxu0 0.0
        %890 = vmatpush1.msra.mxu0 0.0
        %891 = vmatprep.subr.mxu0 0.0
        %892 = vmatpush1.msra.mxu0 0.0
        %893 = vmatprep.subr.mxu0 0.0
        %894 = vmatpush1.msra.mxu0 0.0
        %895 = vmatprep.subr.mxu0 0.0
        %896 = vmatpush1.msra.mxu0 0.0
        %897 = vmatprep.subr.mxu0 0.0
        %898 = vmatpush1.msra.mxu0 0.0
        %899 = vmatprep.subr.mxu0 0.0
        %900 = vmatpush1.msra.mxu0 0.0
        %901 = vmatprep.subr.mxu0 0.0
        %902 = vmatpush1.msra.mxu0 0.0
        %903 = vmatprep.subr.mxu0 0.0
        %904 = vmatpush1.msra.mxu0 0.0
        %905 = vmatprep.subr.mxu0 0.0
        %906 = vmatpush1.msra.mxu0 0.0
        %907 = vmatprep.subr.mxu0 0.0
        %908 = vmatpush1.msra.mxu0 0.0
        %909 = vmatprep.subr.mxu0 0.0
        %910 = vmatpush1.msra.mxu0 0.0
        %911 = vmatprep.subr.mxu0 0.0
        %912 = vmatpush1.msra.mxu0 0.0
        %913 = vmatprep.subr.mxu0 0.0
        %914 = vmatpush1.msra.mxu0 0.0
        %915 = vmatprep.subr.mxu0 0.0
        %916 = vmatpush1.msra.mxu0 0.0
        %917 = vmatprep.subr.mxu0 0.0
        %918 = vmatpush1.msra.mxu0 0.0
        %919 = vmatprep.subr.mxu0 0.0
        %920 = vmatpush1.msra.mxu0 0.0
        %921 = vmatprep.subr.mxu0 0.0
        %922 = vmatpush1.msra.mxu0 0.0
        %923 = vmatprep.mubr.f32.mxu0 0.0
        %924 = vmatmul.mubr.f32.gmra.mrb[0].mxu0 %v853
        %v925 = vpop.f32.mrb[0].mxu0
        %v926 = vadd.f32 0.0, %v925
        %v927 = vpop.f32.mrb[0].mxu0
        %v928 = vadd.f32 0.0, %v927
        %929 = vdwg.mxu0
        %v930 = vadd.f32 %v825, %v926
        %v931 = vadd.f32 %v826, %v928
        %v932 = vld [vmem:[#allocation2] sm:$0xff]
        %v933 = vld [vmem:[#allocation2 + $0x8] sm:$0xf]
        %s934 = scalar_lea.vmem %s1, 28
        %v935 = vld [vmem:[%s934] sm:$0xf]
        %v938 = vcombine.high %v932, %v932
        %939 = vrot.lane.b32.xlu0 %v932, 95
        %v940 = vpop.permute.xlu0 %939
        %941 = vrot.lane.b32.xlu0 %v938, 95
        %v942 = vpop.permute.xlu0 %941
        %943 = vrot.lane.b32.xlu0 %v933, 95
        %v944 = vpop.permute.xlu0 %943
        %vm945 = vcmask 777216
        %v946 = vsel %vm945, %v940, %v942
        %v947 = vsel %vm945, %v942, %v944
        %v949 = vsel %vm246, %v935, 0
        %v951 = vsel %vm250, %v946, 0
        %v953 = vsel %vm250, %v947, 0
        %955 = vmatprep.subr.mxu0 %v953
        %956 = vmatpush1.msra.mxu0 %v951
        %957 = vmatprep.subr.mxu0 0.0
        %958 = vmatpush1.msra.mxu0 0.0
        %959 = vmatprep.subr.mxu0 0.0
        %960 = vmatpush1.msra.mxu0 0.0
        %961 = vmatprep.subr.mxu0 0.0
        %962 = vmatpush1.msra.mxu0 0.0
        %963 = vmatprep.subr.mxu0 0.0
        %964 = vmatpush1.msra.mxu0 0.0
        %965 = vmatprep.subr.mxu0 0.0
        %966 = vmatpush1.msra.mxu0 0.0
        %967 = vmatprep.subr.mxu0 0.0
        %968 = vmatpush1.msra.mxu0 0.0
        %969 = vmatprep.subr.mxu0 0.0
        %970 = vmatpush1.msra.mxu0 0.0
        %971 = vmatprep.subr.mxu0 0.0
        %972 = vmatpush1.msra.mxu0 0.0
        %973 = vmatprep.subr.mxu0 0.0
        %974 = vmatpush1.msra.mxu0 0.0
        %975 = vmatprep.subr.mxu0 0.0
        %976 = vmatpush1.msra.mxu0 0.0
        %977 = vmatprep.subr.mxu0 0.0
        %978 = vmatpush1.msra.mxu0 0.0
        %979 = vmatprep.subr.mxu0 0.0
        %980 = vmatpush1.msra.mxu0 0.0
        %981 = vmatprep.subr.mxu0 0.0
        %982 = vmatpush1.msra.mxu0 0.0
        %983 = vmatprep.subr.mxu0 0.0
        %984 = vmatpush1.msra.mxu0 0.0
        %985 = vmatprep.subr.mxu0 0.0
        %986 = vmatpush1.msra.mxu0 0.0
        %987 = vmatprep.subr.mxu0 0.0
        %988 = vmatpush1.msra.mxu0 0.0
        %989 = vmatprep.subr.mxu0 0.0
        %990 = vmatpush1.msra.mxu0 0.0
        %991 = vmatprep.subr.mxu0 0.0
        %992 = vmatpush1.msra.mxu0 0.0
        %993 = vmatprep.subr.mxu0 0.0
        %994 = vmatpush1.msra.mxu0 0.0
        %995 = vmatprep.subr.mxu0 0.0
        %996 = vmatpush1.msra.mxu0 0.0
        %997 = vmatprep.subr.mxu0 0.0
        %998 = vmatpush1.msra.mxu0 0.0
        %999 = vmatprep.subr.mxu0 0.0
        %1000 = vmatpush1.msra.mxu0 0.0
        %1001 = vmatprep.subr.mxu0 0.0
        %1002 = vmatpush1.msra.mxu0 0.0
        %1003 = vmatprep.subr.mxu0 0.0
        %1004 = vmatpush1.msra.mxu0 0.0
        %1005 = vmatprep.subr.mxu0 0.0
        %1006 = vmatpush1.msra.mxu0 0.0
        %1007 = vmatprep.subr.mxu0 0.0
        %1008 = vmatpush1.msra.mxu0 0.0
        %1009 = vmatprep.subr.mxu0 0.0
        %1010 = vmatpush1.msra.mxu0 0.0
        %1011 = vmatprep.subr.mxu0 0.0
        %1012 = vmatpush1.msra.mxu0 0.0
        %1013 = vmatprep.subr.mxu0 0.0
        %1014 = vmatpush1.msra.mxu0 0.0
        %1015 = vmatprep.subr.mxu0 0.0
        %1016 = vmatpush1.msra.mxu0 0.0
        %1017 = vmatprep.subr.mxu0 0.0
        %1018 = vmatpush1.msra.mxu0 0.0
        %1019 = vmatprep.mubr.f32.mxu0 0.0
        %1020 = vmatmul.mubr.f32.gmra.mrb[0].mxu0 %v949
        %v1021 = vpop.f32.mrb[0].mxu0
        %v1022 = vadd.f32 0.0, %v1021
        %v1023 = vpop.f32.mrb[0].mxu0
        %v1024 = vadd.f32 0.0, %v1023
        %1025 = vdwg.mxu0
        %v1026 = vadd.f32 %v930, %v1022
        %v1027 = vadd.f32 %v931, %v1024
        %v1028 = vld [vmem:[#allocation2] sm:$0xff]
        %v1029 = vld [vmem:[#allocation2 + $0x8] sm:$0xf]
        %1030 = vrot.lane.b32.xlu0 %v417, 34
        %v1031 = vpop.permute.xlu0 %1030
        %v1032 = vrot.slane %v1031, 4
        %vm1033 = vcmask 277504
        %v1034 = vsel %vm1033, %v1032, %v1031
        %v1037 = vmul.f32 %v1028, %v1034
        %v1038 = vmul.f32 %v1029, %v1032
        %s1039 = scalar_lea.vmem %s1, 32
        %v1040 = vld [vmem:[%s1039] sm:$0xf]
        %v1043 = vcombine.high %v1037, %v1037
        %1044 = vrot.lane.b32.xlu0 %v1037, 94
        %v1045 = vpop.permute.xlu0 %1044
        %1046 = vrot.lane.b32.xlu0 %v1043, 94
        %v1047 = vpop.permute.xlu0 %1046
        %1048 = vrot.lane.b32.xlu0 %v1038, 94
        %v1049 = vpop.permute.xlu0 %1048
        %vm1050 = vcmask 769024
        %v1051 = vsel %vm1050, %v1045, %v1047
        %v1052 = vsel %vm1050, %v1047, %v1049
        %v1054 = vsel %vm246, %v1040, 0
        %v1056 = vsel %vm250, %v1051, 0
        %v1058 = vsel %vm250, %v1052, 0
        %1060 = vmatprep.subr.mxu0 %v1058
        %1061 = vmatpush1.msra.mxu0 %v1056
        %1062 = vmatprep.subr.mxu0 0.0
        %1063 = vmatpush1.msra.mxu0 0.0
        %1064 = vmatprep.subr.mxu0 0.0
        %1065 = vmatpush1.msra.mxu0 0.0
        %1066 = vmatprep.subr.mxu0 0.0
        %1067 = vmatpush1.msra.mxu0 0.0
        %1068 = vmatprep.subr.mxu0 0.0
        %1069 = vmatpush1.msra.mxu0 0.0
        %1070 = vmatprep.subr.mxu0 0.0
        %1071 = vmatpush1.msra.mxu0 0.0
        %1072 = vmatprep.subr.mxu0 0.0
        %1073 = vmatpush1.msra.mxu0 0.0
        %1074 = vmatprep.subr.mxu0 0.0
        %1075 = vmatpush1.msra.mxu0 0.0
        %1076 = vmatprep.subr.mxu0 0.0
        %1077 = vmatpush1.msra.mxu0 0.0
        %1078 = vmatprep.subr.mxu0 0.0
        %1079 = vmatpush1.msra.mxu0 0.0
        %1080 = vmatprep.subr.mxu0 0.0
        %1081 = vmatpush1.msra.mxu0 0.0
        %1082 = vmatprep.subr.mxu0 0.0
        %1083 = vmatpush1.msra.mxu0 0.0
        %1084 = vmatprep.subr.mxu0 0.0
        %1085 = vmatpush1.msra.mxu0 0.0
        %1086 = vmatprep.subr.mxu0 0.0
        %1087 = vmatpush1.msra.mxu0 0.0
        %1088 = vmatprep.subr.mxu0 0.0
        %1089 = vmatpush1.msra.mxu0 0.0
        %1090 = vmatprep.subr.mxu0 0.0
        %1091 = vmatpush1.msra.mxu0 0.0
        %1092 = vmatprep.subr.mxu0 0.0
        %1093 = vmatpush1.msra.mxu0 0.0
        %1094 = vmatprep.subr.mxu0 0.0
        %1095 = vmatpush1.msra.mxu0 0.0
        %1096 = vmatprep.subr.mxu0 0.0
        %1097 = vmatpush1.msra.mxu0 0.0
        %1098 = vmatprep.subr.mxu0 0.0
        %1099 = vmatpush1.msra.mxu0 0.0
        %1100 = vmatprep.subr.mxu0 0.0
        %1101 = vmatpush1.msra.mxu0 0.0
        %1102 = vmatprep.subr.mxu0 0.0
        %1103 = vmatpush1.msra.mxu0 0.0
        %1104 = vmatprep.subr.mxu0 0.0
        %1105 = vmatpush1.msra.mxu0 0.0
        %1106 = vmatprep.subr.mxu0 0.0
        %1107 = vmatpush1.msra.mxu0 0.0
        %1108 = vmatprep.subr.mxu0 0.0
        %1109 = vmatpush1.msra.mxu0 0.0
        %1110 = vmatprep.subr.mxu0 0.0
        %1111 = vmatpush1.msra.mxu0 0.0
        %1112 = vmatprep.subr.mxu0 0.0
        %1113 = vmatpush1.msra.mxu0 0.0
        %1114 = vmatprep.subr.mxu0 0.0
        %1115 = vmatpush1.msra.mxu0 0.0
        %1116 = vmatprep.subr.mxu0 0.0
        %1117 = vmatpush1.msra.mxu0 0.0
        %1118 = vmatprep.subr.mxu0 0.0
        %1119 = vmatpush1.msra.mxu0 0.0
        %1120 = vmatprep.subr.mxu0 0.0
        %1121 = vmatpush1.msra.mxu0 0.0
        %1122 = vmatprep.subr.mxu0 0.0
        %1123 = vmatpush1.msra.mxu0 0.0
        %1124 = vmatprep.mubr.f32.mxu0 0.0
        %1125 = vmatmul.mubr.f32.gmra.mrb[0].mxu0 %v1054
        %v1126 = vpop.f32.mrb[0].mxu0
        %v1127 = vadd.f32 0.0, %v1126
        %v1128 = vpop.f32.mrb[0].mxu0
        %v1129 = vadd.f32 0.0, %v1128
        %1130 = vdwg.mxu0
        %v1131 = vadd.f32 %v1026, %v1127
        %v1132 = vadd.f32 %v1027, %v1129
        %v1133 = vld [vmem:[%s2] sm:$0xf]
        %1135 = vset.pattern.permute.xlu0 0
        %1136 = vperm.xlu0 %1135, %v1133
        %v1137 = vpop.permute.xlu0 %1136
        %v1139 = vadd.f32 %v1131, %v1137
        %v1140 = vadd.f32 %v1132, %v1137
        %v1141 = vsub.f32 0.0, %v1139
        %v1142 = vsub.f32 0.0, %v1140
        %v1143 = vmul.f32 %v1141, 1.442695
        %v1144 = vpow.pop %v1143
        %v1145 = vmul.f32 %v1142, 1.442695
        %v1146 = vpow.pop %v1145
        %v1147 = vadd.f32 %v1144, 1.0
        %v1148 = vadd.f32 %v1146, 1.0
        %v1149 = vrcp.pop %v1147
        %v1150 = vmul.f32 1.0, %v1149
        %v1151 = vrcp.pop %v1148
        %v1152 = vmul.f32 1.0, %v1151
        %v1153 = vmul.f32 %v1139, %v1150
        %v1154 = vmul.f32 %v1140, %v1152
        %v1157 = vcombine.low %v1153, %v1154
        %1159 = vst [vmem:[%s190] sm:$0xff] %v1157
        %s1160 = sand.u32 %s115, 1
        %s1161 = scalar_lea.sflag [#allocation5], %s1160
        %s1162 = sand.u32 %s115, 1
        %s1163 = smul.addr %s1162, 8
        %s1164 = scalar_lea.vmem [#allocation4], %s1163
        // Predicated region
        $region37: #{tpu_custom_call.1} parent=35 // pred_check
          %p1165 = pneg %p125
        $region38: #{tpu_custom_call.1} parent=35 // pred_check_branch
          %1167 = sbr.rel (%p1165) target = $region40
        $region39: #{tpu_custom_call.1} parent=35 // pred_region
          %s1169 = ssub.s32 128, 128
          %1170 = vsyncadd %s1161, %s1169
          %s1171 = smul.addr %s18, 2
          %s1172 = smul.addr %s1171, 64
          %s1173 = scalar_lea.hbm %s4, %s1172
          %s1175 = sshll.u32 %s1164, 4
          %s1176 = int_to_ptr.vmem [resolvable:$true] %s1175
          %1178 = dma.vmem_to_hbm [thread:$0]  %s1176, 128, %s1173, %s1161
        $region40: #{tpu_custom_call.1} parent=35 // pred_fallthru
          _
      $region36: #{tpu_custom_call.1} parent=5 // pred_fallthru
        _
      %p1179 = scmp.le.s32.totalorder 2, %s13
      // Predicated region
      $region41: #{tpu_custom_call.1} parent=5 // pred_check
        %p1180 = pneg %p1179
      $region42: #{tpu_custom_call.1} parent=5 // pred_check_branch
        %1182 = sbr.rel (%p1180) target = $region44
      $region43: #{tpu_custom_call.1} parent=5 // pred_region
        %s1183 = ssub.s32 %s13, 2
        // Predicated region
        $region45: #{tpu_custom_call.1} parent=43 // pred_check
          %p1184 = pneg %p131
        $region46: #{tpu_custom_call.1} parent=43 // pred_check_branch
          %1186 = sbr.rel (%p1184) target = $region48
        $region47: #{tpu_custom_call.1} parent=43 // pred_region
          %s1187 = sand.u32 %s116, 1
          %s1188 = scalar_lea.sflag [#allocation5], %s1187
          %s1189 = sand.u32 %s116, 1
          %s1190 = smul.addr %s1189, 8
          %s1191 = scalar_lea.vmem [#allocation4], %s1190
          %1192 = dma.done %s1188, 128
        $region48: #{tpu_custom_call.1} parent=43 // pred_fallthru
          _
      $region44: #{tpu_custom_call.1} parent=5 // pred_fallthru
        _
    $region6: #{tpu_custom_call.1} parent=1 // loop_footer
      %s17 = sadd.s32 1, %s13
    $region7: #{tpu_custom_call.1} parent=1 // loop_footer_branch
      %12 = sbr.rel target = $region3
    $region8: #{tpu_custom_call.1} parent=1 // loop_exit
      _
    %1193 = vsyncpa [#allocation5], 1
    %s1194 = scalar_lea.sflag [#allocation5], 1
    %1195 = vsyncpa %s1194, 1

</llo_original>
